<compile_context>
chip_gen: v7x
topology: tpu7x:2x2x1
jax: 0.10.0
libtpu: 0.0.40
codegen_flags: <defaults>
</compile_context>

<pallas_src>
import jax
import jax.numpy as jnp
from jax.experimental import pallas as pl
from jax.experimental.pallas import tpu as pltpu


def mlp_kernel(x_ref, w1_ref, b1_ref, w2_ref, b2_ref, o_ref):
    # net1: (TB,10) @ (10,10) -> (TB,10), f32 accumulation on the MXU.
    h = jnp.dot(x_ref[...], w1_ref[...], preferred_element_type=jnp.float32)
    h = jnp.maximum(h + b1_ref[...], 0.0)          # bias broadcast (1,10) + ReLU
    # net2: (TB,10) @ (10,5) -> (TB,5)
    out = jnp.dot(h, w2_ref[...], preferred_element_type=jnp.float32) + b2_ref[...]
    o_ref[...] = out.astype(o_ref.dtype)


def _align8(n):
    return ((n + 7) // 8) * 8


def toy_model_forward(x, w1, b1, w2, b2, *, block_batch=4096):
    """x: (B, 10); w1: (10, 10) [in, out]; b1: (10,); w2: (10, 5); b2: (5,)."""
    B, in_f = x.shape
    hid = w1.shape[1]
    out_f = w2.shape[1]
    dtype = x.dtype

    # Batch tile: 8-aligned, capped at block_batch, and <= ~B/2 when B is big enough so
    # that the grid has >= 2 steps (keeps both v7x TensorCores busy via "parallel").
    TB = max(8, min(block_batch, _align8(pl.cdiv(B, 2))))
    B_pad = pl.cdiv(B, TB) * TB

    # Pad the batch dim only (no lane padding anywhere in HBM).
    x_p = x if B_pad == B else jnp.pad(x, ((0, B_pad - B), (0, 0)))
    b1_2d = b1.reshape(1, hid)
    b2_2d = b2.reshape(1, out_f)

    grid = (B_pad // TB,)

    cost = pl.CostEstimate(
        flops=2 * B_pad * (in_f * hid + hid * out_f),
        bytes_accessed=(B_pad * in_f + B_pad * out_f
                        + in_f * hid + hid + hid * out_f + out_f) * 4,
        transcendentals=0,
    )

    out_p = pl.pallas_call(
        mlp_kernel,
        out_shape=jax.ShapeDtypeStruct((B_pad, out_f), dtype),
        grid=grid,
        in_specs=[
            pl.BlockSpec((TB, in_f), lambda i: (i, 0)),      # x: tiled over batch, narrow lanes
            pl.BlockSpec((in_f, hid), lambda i: (0, 0)),     # w1: VMEM-resident
            pl.BlockSpec((1, hid), lambda i: (0, 0)),        # b1: VMEM-resident
            pl.BlockSpec((hid, out_f), lambda i: (0, 0)),    # w2: VMEM-resident
            pl.BlockSpec((1, out_f), lambda i: (0, 0)),      # b2: VMEM-resident
        ],
        out_specs=pl.BlockSpec((TB, out_f), lambda i: (i, 0)),  # narrow output in HBM
        compiler_params=pltpu.CompilerParams(
            dimension_semantics=("parallel",),               # megacore sharding on v7x
            vmem_limit_bytes=32 * 1024 * 1024,               # headroom over v5e 16 MiB default
        ),
        cost_estimate=cost,
    )(x_p, w1, b1_2d, w2, b2_2d)

    return out_p if B_pad == B else out_p[:B]


def init_params(key):
    """Deterministic init mimicking torch.nn.Linear (uniform +/- 1/sqrt(fan_in))."""
    k1, k2, k3, k4 = jax.random.split(key, 4)
    bound = 1.0 / jnp.sqrt(10.0)
    # Stored as (in_features, out_features), i.e. transposed PyTorch layout.
    w1 = jax.random.uniform(k1, (10, 10), jnp.float32, -bound, bound)
    b1 = jax.random.uniform(k2, (10,), jnp.float32, -bound, bound)
    w2 = jax.random.uniform(k3, (10, 5), jnp.float32, -bound, bound)
    b2 = jax.random.uniform(k4, (5,), jnp.float32, -bound, bound)
    return w1, b1, w2, b2


def _reference(x, w1, b1, w2, b2):
    return jnp.maximum(x @ w1 + b1, 0.0) @ w2 + b2


if __name__ == "__main__":
    key = jax.random.PRNGKey(0)
    key_x, key_x2, key_p = jax.random.split(key, 3)
    w1, b1, w2, b2 = init_params(key_p)

    # Small batch (matches original spec usage).
    batch = 8
    x = jax.random.normal(key_x, (batch, 10), jnp.float32)
    out = jax.block_until_ready(toy_model_forward(x, w1, b1, w2, b2))
    assert out.shape == (batch, 5)
    assert jnp.allclose(out, _reference(x, w1, b1, w2, b2), atol=1e-5), "mismatch (small batch)"

    # Larger batch to exercise the batch grid / pipelining (TB=2048 -> 2 grid steps).
    batch_big = 4096
    x_big = jax.random.normal(key_x2, (batch_big, 10), jnp.float32)
    out_big = jax.block_until_ready(toy_model_forward(x_big, w1, b1, w2, b2))
    assert out_big.shape == (batch_big, 5)
    assert jnp.allclose(out_big, _reference(x_big, w1, b1, w2, b2), atol=1e-4), "mismatch (big batch)"

    print("KERNEL_OK")
</pallas_src>

<mosaic_0001>
module attributes {stable_mosaic.version = 11 : i64} {
  func.func @mlp_kernel(%arg0: i32, %arg1: memref<8x10xf32, #tpu.memory_space<vmem>>, %arg2: memref<10x10xf32, #tpu.memory_space<vmem>>, %arg3: memref<1x10xf32, #tpu.memory_space<vmem>>, %arg4: memref<10x5xf32, #tpu.memory_space<vmem>>, %arg5: memref<1x5xf32, #tpu.memory_space<vmem>>, %arg6: memref<8x5xf32, #tpu.memory_space<vmem>>) attributes {dimension_semantics = [#tpu.dimension_semantics<parallel>], iteration_bounds = array<i64: 1>, scalar_prefetch = 0 : i64, scratch_operands = 0 : i64, tpu.core_type = #tpu.core_type<tc>, window_params = [{transform_indices = @transform_0, window_bounds = array<i64: 8, 10>}, {pipeline_mode = #tpu.pipeline_mode<synchronous>, transform_indices = @transform_1, window_bounds = array<i64: 10, 10>}, {pipeline_mode = #tpu.pipeline_mode<synchronous>, transform_indices = @transform_2, window_bounds = array<i64: 1, 10>}, {pipeline_mode = #tpu.pipeline_mode<synchronous>, transform_indices = @transform_3, window_bounds = array<i64: 10, 5>}, {pipeline_mode = #tpu.pipeline_mode<synchronous>, transform_indices = @transform_4, window_bounds = array<i64: 1, 5>}, {transform_indices = @transform_5, window_bounds = array<i64: 8, 5>}]} {
    %c0 = arith.constant 0 : index
    %c0_0 = arith.constant 0 : index
    %0 = vector.load %arg1[%c0, %c0_0] : memref<8x10xf32, #tpu.memory_space<vmem>>, vector<8x10xf32>
    %c0_1 = arith.constant 0 : index
    %c0_2 = arith.constant 0 : index
    %1 = vector.load %arg2[%c0_1, %c0_2] : memref<10x10xf32, #tpu.memory_space<vmem>>, vector<10x10xf32>
    %cst = arith.constant dense<0.000000e+00> : vector<8x10xf32>
    %2 = tpu.matmul %0, %1, %cst {dimension_numbers = #tpu.dot_dimension_numbers<[1], [0], [0], [1], [0, 0, 1, 1], [], []>} : vector<8x10xf32>, vector<10x10xf32>, vector<8x10xf32> -> vector<8x10xf32>
    %c0_3 = arith.constant 0 : index
    %c0_4 = arith.constant 0 : index
    %3 = vector.load %arg3[%c0_3, %c0_4] : memref<1x10xf32, #tpu.memory_space<vmem>>, vector<1x10xf32>
    %4 = vector.broadcast %3 : vector<1x10xf32> to vector<8x10xf32>
    %5 = arith.addf %2, %4 : vector<8x10xf32>
    %cst_5 = arith.constant 0.000000e+00 : f32
    %6 = vector.broadcast %cst_5 : f32 to vector<8x10xf32>
    %7 = arith.maximumf %5, %6 : vector<8x10xf32>
    %c0_6 = arith.constant 0 : index
    %c0_7 = arith.constant 0 : index
    %8 = vector.load %arg4[%c0_6, %c0_7] : memref<10x5xf32, #tpu.memory_space<vmem>>, vector<10x5xf32>
    %cst_8 = arith.constant dense<0.000000e+00> : vector<8x5xf32>
    %9 = tpu.matmul %7, %8, %cst_8 {dimension_numbers = #tpu.dot_dimension_numbers<[1], [0], [0], [1], [0, 0, 1, 1], [], []>} : vector<8x10xf32>, vector<10x5xf32>, vector<8x5xf32> -> vector<8x5xf32>
    %c0_9 = arith.constant 0 : index
    %c0_10 = arith.constant 0 : index
    %10 = vector.load %arg5[%c0_9, %c0_10] : memref<1x5xf32, #tpu.memory_space<vmem>>, vector<1x5xf32>
    %11 = vector.broadcast %10 : vector<1x5xf32> to vector<8x5xf32>
    %12 = arith.addf %9, %11 : vector<8x5xf32>
    %c0_11 = arith.constant 0 : index
    %c0_12 = arith.constant 0 : index
    %13 = vector.load %arg6[%c0_11, %c0_12] : memref<8x5xf32, #tpu.memory_space<vmem>>, vector<8x5xf32>
    tpu.vector_store %arg6[%c0_11, %c0_12], %12 {strides = array<i32>} : memref<8x5xf32, #tpu.memory_space<vmem>>, vector<8x5xf32>,
    return
  }
  func.func @transform_0(%arg0: i32) -> (i32, i32) {
    %c0_i32 = arith.constant 0 : i32
    %c0_i32_0 = arith.constant 0 : i32
    return %arg0, %c0_i32 : i32, i32
  }
  func.func @transform_1(%arg0: i32) -> (i32, i32) {
    %c0_i32 = arith.constant 0 : i32
    %c0_i32_0 = arith.constant 0 : i32
    %c0_i32_1 = arith.constant 0 : i32
    return %c0_i32, %c0_i32_0 : i32, i32
  }
  func.func @transform_2(%arg0: i32) -> (i32, i32) {
    %c0_i32 = arith.constant 0 : i32
    %c0_i32_0 = arith.constant 0 : i32
    %c0_i32_1 = arith.constant 0 : i32
    return %c0_i32, %c0_i32_0 : i32, i32
  }
  func.func @transform_3(%arg0: i32) -> (i32, i32) {
    %c0_i32 = arith.constant 0 : i32
    %c0_i32_0 = arith.constant 0 : i32
    %c0_i32_1 = arith.constant 0 : i32
    return %c0_i32, %c0_i32_0 : i32, i32
  }
  func.func @transform_4(%arg0: i32) -> (i32, i32) {
    %c0_i32 = arith.constant 0 : i32
    %c0_i32_0 = arith.constant 0 : i32
    %c0_i32_1 = arith.constant 0 : i32
    return %c0_i32, %c0_i32_0 : i32, i32
  }
  func.func @transform_5(%arg0: i32) -> (i32, i32) {
    %c0_i32 = arith.constant 0 : i32
    %c0_i32_0 = arith.constant 0 : i32
    return %arg0, %c0_i32 : i32, i32
  }
}

</mosaic_0001>

<llo_original>
// kernel: tpu_custom_call.1
$region0: #{tpu_custom_call.1}
  #allocation0 [shape = 'u32[]', space=smem, size = 0x4, offset = 0x4, fixed_abs, tag = 'smem constant byte address 0x4 - core index']
  #allocation1 [shape = 'u32[144,128]{1,0:T(1,128)}', space=vmem, size = 0x12000, scoped, tag = 'internal scratch']
  %s0 = inlined_call_operand.vmem [shape: f32[8,10], index: 0, kind: input, shape index: {}]
  %s1 = inlined_call_operand.vmem [shape: f32[10,10], index: 1, kind: input, shape index: {}]
  %s2 = inlined_call_operand.vmem [shape: f32[1,10], index: 2, kind: input, shape index: {}]
  %s3 = inlined_call_operand.vmem [shape: f32[10,5], index: 3, kind: input, shape index: {}]
  %s4 = inlined_call_operand.vmem [shape: f32[1,5], index: 4, kind: input, shape index: {}]
  %s5 = inlined_call_operand.hbm [shape: f32[8,5], index: 5, kind: output, shape index: {}]
  %s6 = sld [smem:[#allocation0]]
  $region30: #{tpu_custom_call.1} parent=0
    _
  %s8 = ssub.s32 1, %s6
  %s9 = scalar_select 0, %s8, %s6
  $region1: #{tpu_custom_call.1} parent=0
    #allocation2 [shape = 'u8[4096]{0}', space=vmem, size = 0x1000, scoped, tag = 'output window, operand 0, single buffered']
    #allocation3 [shape = 's32[1]{0}', space=sflag, size = 0x4, scoped, tag = 'scoped memory for tpu_custom_call.1']
    %10 = vsyncpa [#allocation3], 0
    // Predicated region
    $region2: #{tpu_custom_call.1} parent=1 // pred_check
      _
    $region3: #{tpu_custom_call.1} parent=1 // pred_check_branch
      %12 = sbr.rel (0) target = $region5
    $region4: #{tpu_custom_call.1} parent=1 // pred_region
      _
    $region5: #{tpu_custom_call.1} parent=1 // pred_fallthru
      _
    // Predicated region
    $region6: #{tpu_custom_call.1} parent=1 // pred_check
      _
    $region7: #{tpu_custom_call.1} parent=1 // pred_check_branch
      %14 = sbr.rel (0) target = $region9
    $region8: #{tpu_custom_call.1} parent=1 // pred_region
      _
    $region9: #{tpu_custom_call.1} parent=1 // pred_fallthru
      _
    // Predicated region
    $region10: #{tpu_custom_call.1} parent=1 // pred_check
      _
    $region11: #{tpu_custom_call.1} parent=1 // pred_check_branch
      %16 = sbr.rel (0) target = $region13
    $region12: #{tpu_custom_call.1} parent=1 // pred_region
      _
    $region13: #{tpu_custom_call.1} parent=1 // pred_fallthru
      _
    // Predicated region
    $region14: #{tpu_custom_call.1} parent=1 // pred_check
      _
    $region15: #{tpu_custom_call.1} parent=1 // pred_check_branch
      %18 = sbr.rel (0) target = $region17
    $region16: #{tpu_custom_call.1} parent=1 // pred_region
      _
    $region17: #{tpu_custom_call.1} parent=1 // pred_fallthru
      _
    // Predicated region
    $region18: #{tpu_custom_call.1} parent=1 // pred_check
      _
    $region19: #{tpu_custom_call.1} parent=1 // pred_check_branch
      %20 = sbr.rel (0) target = $region21
    $region20: #{tpu_custom_call.1} parent=1 // pred_region
      _
    $region21: #{tpu_custom_call.1} parent=1 // pred_fallthru
      _
    %v21 = vld [vmem:[%s0] sm:$0xff]
    %v22 = vld [vmem:[%s1] sm:$0xff]
    %v23 = vld [vmem:[%s1 + $0x8] sm:$0x3]
    %v24 = vld [vmem:[%s2] sm:$0x1]
    %v26 = vlaneseq
    %v27 = vshrl.u32 %v26, 7
    %v28 = vsub.s32 0, %v27
    %v29 = vrot.slane %v24, %v28
    %vm31 = vcmask 80896
    %v33 = vsel %vm31, %v21, 0
    %vm35 = vcmask 1041408
    %v37 = vsel %vm35, %v23, 0
    %39 = vmatprep.subr.mxu0 0.0
    %40 = vmatpush1.msra.mxu0 %v22
    %41 = vmatprep.subr.mxu0 0.0
    %42 = vmatpush1.msra.mxu0 %v37
    %43 = vmatprep.subr.mxu0 0.0
    %44 = vmatpush1.msra.mxu0 0.0
    %45 = vmatprep.subr.mxu0 0.0
    %46 = vmatpush1.msra.mxu0 0.0
    %47 = vmatprep.subr.mxu0 0.0
    %48 = vmatpush1.msra.mxu0 0.0
    %49 = vmatprep.subr.mxu0 0.0
    %50 = vmatpush1.msra.mxu0 0.0
    %51 = vmatprep.subr.mxu0 0.0
    %52 = vmatpush1.msra.mxu0 0.0
    %53 = vmatprep.subr.mxu0 0.0
    %54 = vmatpush1.msra.mxu0 0.0
    %55 = vmatprep.subr.mxu0 0.0
    %56 = vmatpush1.msra.mxu0 0.0
    %57 = vmatprep.subr.mxu0 0.0
    %58 = vmatpush1.msra.mxu0 0.0
    %59 = vmatprep.subr.mxu0 0.0
    %60 = vmatpush1.msra.mxu0 0.0
    %61 = vmatprep.subr.mxu0 0.0
    %62 = vmatpush1.msra.mxu0 0.0
    %63 = vmatprep.subr.mxu0 0.0
    %64 = vmatpush1.msra.mxu0 0.0
    %65 = vmatprep.subr.mxu0 0.0
    %66 = vmatpush1.msra.mxu0 0.0
    %67 = vmatprep.subr.mxu0 0.0
    %68 = vmatpush1.msra.mxu0 0.0
    %69 = vmatprep.subr.mxu0 0.0
    %70 = vmatpush1.msra.mxu0 0.0
    %71 = vmatprep.subr.mxu0 0.0
    %72 = vmatpush1.msra.mxu0 0.0
    %73 = vmatprep.subr.mxu0 0.0
    %74 = vmatpush1.msra.mxu0 0.0
    %75 = vmatprep.subr.mxu0 0.0
    %76 = vmatpush1.msra.mxu0 0.0
    %77 = vmatprep.subr.mxu0 0.0
    %78 = vmatpush1.msra.mxu0 0.0
    %79 = vmatprep.subr.mxu0 0.0
    %80 = vmatpush1.msra.mxu0 0.0
    %81 = vmatprep.subr.mxu0 0.0
    %82 = vmatpush1.msra.mxu0 0.0
    %83 = vmatprep.subr.mxu0 0.0
    %84 = vmatpush1.msra.mxu0 0.0
    %85 = vmatprep.subr.mxu0 0.0
    %86 = vmatpush1.msra.mxu0 0.0
    %87 = vmatprep.subr.mxu0 0.0
    %88 = vmatpush1.msra.mxu0 0.0
    %89 = vmatprep.subr.mxu0 0.0
    %90 = vmatpush1.msra.mxu0 0.0
    %91 = vmatprep.subr.mxu0 0.0
    %92 = vmatpush1.msra.mxu0 0.0
    %93 = vmatprep.subr.mxu0 0.0
    %94 = vmatpush1.msra.mxu0 0.0
    %95 = vmatprep.subr.mxu0 0.0
    %96 = vmatpush1.msra.mxu0 0.0
    %97 = vmatprep.subr.mxu0 0.0
    %98 = vmatpush1.msra.mxu0 0.0
    %99 = vmatprep.subr.mxu0 0.0
    %100 = vmatpush1.msra.mxu0 0.0
    %101 = vmatprep.subr.mxu0 0.0
    %102 = vmatpush1.msra.mxu0 0.0
    %103 = vmatprep.mubr.f32.mxu0 0.0
    %104 = vmatmul.mubr.f32.gmra.mrb[0].mxu0 %v33
    %v105 = vpop.f32.mrb[0].mxu0
    %v106 = vadd.f32 %v29, %v105
    %v107 = vpop.f32.mrb[0].mxu0
    %108 = vdwg.mxu0
    %v109 = vmax.f32 %v106, 0.0
    %v110 = vld [vmem:[%s3] sm:$0xff]
    %v111 = vld [vmem:[%s3 + $0x8] sm:$0x3]
    %v112 = vld [vmem:[%s4] sm:$0x1]
    %v114 = vlaneseq
    %v115 = vshrl.u32 %v114, 7
    %v116 = vsub.s32 0, %v115
    %v117 = vrot.slane %v112, %v116
    %v120 = vsel %vm31, %v109, 0
    %v123 = vsel %vm35, %v111, 0
    %125 = vmatprep.subr.mxu0 0.0
    %126 = vmatpush1.msra.mxu0 %v110
    %127 = vmatprep.subr.mxu0 0.0
    %128 = vmatpush1.msra.mxu0 %v123
    %129 = vmatprep.subr.mxu0 0.0
    %130 = vmatpush1.msra.mxu0 0.0
    %131 = vmatprep.subr.mxu0 0.0
    %132 = vmatpush1.msra.mxu0 0.0
    %133 = vmatprep.subr.mxu0 0.0
    %134 = vmatpush1.msra.mxu0 0.0
    %135 = vmatprep.subr.mxu0 0.0
    %136 = vmatpush1.msra.mxu0 0.0
    %137 = vmatprep.subr.mxu0 0.0
    %138 = vmatpush1.msra.mxu0 0.0
    %139 = vmatprep.subr.mxu0 0.0
    %140 = vmatpush1.msra.mxu0 0.0
    %141 = vmatprep.subr.mxu0 0.0
    %142 = vmatpush1.msra.mxu0 0.0
    %143 = vmatprep.subr.mxu0 0.0
    %144 = vmatpush1.msra.mxu0 0.0
    %145 = vmatprep.subr.mxu0 0.0
    %146 = vmatpush1.msra.mxu0 0.0
    %147 = vmatprep.subr.mxu0 0.0
    %148 = vmatpush1.msra.mxu0 0.0
    %149 = vmatprep.subr.mxu0 0.0
    %150 = vmatpush1.msra.mxu0 0.0
    %151 = vmatprep.subr.mxu0 0.0
    %152 = vmatpush1.msra.mxu0 0.0
    %153 = vmatprep.subr.mxu0 0.0
    %154 = vmatpush1.msra.mxu0 0.0
    %155 = vmatprep.subr.mxu0 0.0
    %156 = vmatpush1.msra.mxu0 0.0
    %157 = vmatprep.subr.mxu0 0.0
    %158 = vmatpush1.msra.mxu0 0.0
    %159 = vmatprep.subr.mxu0 0.0
    %160 = vmatpush1.msra.mxu0 0.0
    %161 = vmatprep.subr.mxu0 0.0
    %162 = vmatpush1.msra.mxu0 0.0
    %163 = vmatprep.subr.mxu0 0.0
    %164 = vmatpush1.msra.mxu0 0.0
    %165 = vmatprep.subr.mxu0 0.0
    %166 = vmatpush1.msra.mxu0 0.0
    %167 = vmatprep.subr.mxu0 0.0
    %168 = vmatpush1.msra.mxu0 0.0
    %169 = vmatprep.subr.mxu0 0.0
    %170 = vmatpush1.msra.mxu0 0.0
    %171 = vmatprep.subr.mxu0 0.0
    %172 = vmatpush1.msra.mxu0 0.0
    %173 = vmatprep.subr.mxu0 0.0
    %174 = vmatpush1.msra.mxu0 0.0
    %175 = vmatprep.subr.mxu0 0.0
    %176 = vmatpush1.msra.mxu0 0.0
    %177 = vmatprep.subr.mxu0 0.0
    %178 = vmatpush1.msra.mxu0 0.0
    %179 = vmatprep.subr.mxu0 0.0
    %180 = vmatpush1.msra.mxu0 0.0
    %181 = vmatprep.subr.mxu0 0.0
    %182 = vmatpush1.msra.mxu0 0.0
    %183 = vmatprep.subr.mxu0 0.0
    %184 = vmatpush1.msra.mxu0 0.0
    %185 = vmatprep.subr.mxu0 0.0
    %186 = vmatpush1.msra.mxu0 0.0
    %187 = vmatprep.subr.mxu0 0.0
    %188 = vmatpush1.msra.mxu0 0.0
    %189 = vmatprep.mubr.f32.mxu0 0.0
    %190 = vmatmul.mubr.f32.gmra.mrb[0].mxu0 %v120
    %v191 = vpop.f32.mrb[0].mxu0
    %v192 = vadd.f32 %v117, %v191
    %v193 = vpop.f32.mrb[0].mxu0
    %194 = vdwg.mxu0
    %vm195 = vcmask 39936
    %196 = vst.msk [vmem:[#allocation2] sm:$0xff] %vm195, %v192
    // Predicated region
    $region22: #{tpu_custom_call.1} parent=1 // pred_check
      _
    $region23: #{tpu_custom_call.1} parent=1 // pred_check_branch
      %198 = sbr.rel (0) target = $region25
    $region24: #{tpu_custom_call.1} parent=1 // pred_region
      %s200 = ssub.s32 128, 128
      %201 = vsyncadd [#allocation3], %s200
      %s203 = sshll.u32 [#allocation2], 4
      %s204 = int_to_ptr.vmem [resolvable:$true] %s203
      %206 = dma.vmem_to_hbm [thread:$0]  %s204, 128, %s5, [#allocation3]
    $region25: #{tpu_custom_call.1} parent=1 // pred_fallthru
      _
    // Predicated region
    $region26: #{tpu_custom_call.1} parent=1 // pred_check
      _
    $region27: #{tpu_custom_call.1} parent=1 // pred_check_branch
      %208 = sbr.rel (0) target = $region29
    $region28: #{tpu_custom_call.1} parent=1 // pred_region
      %209 = dma.done [#allocation3], 128
    $region29: #{tpu_custom_call.1} parent=1 // pred_fallthru
      _
    %210 = vsyncpa [#allocation3], 1

</llo_original>
